<compile_context>
chip_gen: v5e
topology: v5e:2x2
jax: 0.10.0
libtpu: 0.0.40
codegen_flags: <defaults>
</compile_context>

<pallas_src>
import functools

import jax
import jax.numpy as jnp
from jax.experimental import pallas as pl
from jax.experimental.pallas import tpu as pltpu

_LANE = 128
_SUBLANE = 8


def _round_up(x, m):
    return (x + m - 1) // m * m


# ----------------------------- Pallas kernel --------------------------------
def _disc_kernel(xcol_ref,          # (SPB*B*Lp, FEp) bf16  im2col embedding windows
                 mask_ref,          # (Lp, C) f32           static validity mask
                 wc_ref, bc_ref,    # (FEp, C) bf16, (1, C) f32  fused conv weights
                 wh_ref, bh_ref,    # (C, C) bf16,  (1, C) f32  highway (pre-transposed)
                 wo_ref, bo_ref,    # (C, C) bf16,  (1, C) f32  feature2out (pre-transposed)
                 out_ref,           # (SPB*B, C) f32  (real logits live in lanes [0, 2))
                 *, lp):
    rows = out_ref.shape[0]
    C = out_ref.shape[-1]

    # ---- fused conv: both filter widths in ONE MXU matmul over im2col windows ----
    conv = jnp.dot(xcol_ref[...], wc_ref[...],
                   preferred_element_type=jnp.float32)            # (rows*Lp, C) f32
    conv = jnp.maximum(conv + bc_ref[...], 0.0)                   # bias + F.relu

    # ---- max_pool1d over time, per filter bank (mask is a trace-time constant) ----
    conv = conv.reshape(rows, lp, C) * mask_ref[...]
    pooled = jnp.max(conv, axis=1)                                # (rows, C)

    # ---- highway layer -------------------------------------------------------------
    hw = jnp.dot(pooled.astype(wh_ref.dtype), wh_ref[...],
                 preferred_element_type=jnp.float32) + bh_ref[...]
    sig = jax.nn.sigmoid(hw)
    pred = sig * jnp.maximum(hw, 0.0) + (1.0 - sig) * pooled

    # dropout(p=0.2) is identity at inference time (eval mode)
    # TODO(synk): training-mode dropout (stochastic masking) not implemented.

    # ---- feature2out linear (lane-padded to C so the store is lane-dense) ----------
    out_ref[...] = jnp.dot(pred.astype(wo_ref.dtype), wo_ref[...],
                           preferred_element_type=jnp.float32) + bo_ref[...]


# --------------------------- host-side weight packing ------------------------
def pack_kernel_params(params, filter_sizes, num_filters, padding_idx,
                       compute_dtype=jnp.bfloat16):
    """Pre-transpose, fuse the two conv banks, lane-pad everything to 128 and
    pad the im2col contraction dim FE = f_max*E up to a full 128-lane tile."""
    (f1, f2), (n1, n2) = filter_sizes, num_filters
    E = params["embed"].shape[1]
    f_max = max(f1, f2)
    n_tot = n1 + n2
    C = _round_up(max(n_tot, _LANE), _LANE)
    FEp = _round_up(f_max * E, _LANE)        # padded contraction dim

    # mask-after-ReLU and zero-rows-for-the-shorter-filter both rely on this:
    assert bool(jnp.all(params["embed"][padding_idx] == 0.0)), \
        "padding_idx embedding row must be exactly zero"

    # fused conv weight: column c = row-major (j, e) flattened filter of channel c.
    # Unused rows of the shorter filter, the FE->FEp padding rows, and all padded
    # channels are zero.
    wc = jnp.zeros((FEp, C), jnp.float32)
    wc = wc.at[:f1 * E, :n1].set(
        jnp.transpose(params["w1"], (1, 2, 0)).reshape(f1 * E, n1))
    wc = wc.at[:f2 * E, n1:n_tot].set(
        jnp.transpose(params["w2"], (1, 2, 0)).reshape(f2 * E, n2))
    bc = jnp.zeros((1, C), jnp.float32)
    bc = bc.at[0, :n1].set(params["b1"][0]).at[0, n1:n_tot].set(params["b2"][0])

    # highway / feature2out: pre-transposed (so kernel does x @ W) and zero-padded.
    wh = jnp.zeros((C, C), jnp.float32).at[:n_tot, :n_tot].set(params["wh"].T)
    bh = jnp.zeros((1, C), jnp.float32).at[0, :n_tot].set(params["bh"][0])
    wo = jnp.zeros((C, C), jnp.float32).at[:n_tot, :2].set(params["wo"].T)
    bo = jnp.zeros((1, C), jnp.float32).at[0, :2].set(params["bo"][0])

    return dict(embed=params["embed"].astype(compute_dtype),   # bf16 gather source
                wc=wc.astype(compute_dtype), bc=bc,
                wh=wh.astype(compute_dtype), bh=bh,
                wo=wo.astype(compute_dtype), bo=bo)


# ------------------------------ JAX wrappers ----------------------------------
@functools.partial(jax.jit, static_argnames=("filter_sizes", "num_filters",
                                             "padding_idx", "samples_per_block"))
def cnn_discriminator_forward_batched(inp_tokens, packed, *, filter_sizes,
                                      num_filters, padding_idx,
                                      samples_per_block=None):
    """inp_tokens: int (num_samples, batch*seq). Returns (num_samples, 2, 2) logits.

    Batches many discriminator invocations into a single pallas_call: the grid
    runs over sample-blocks, weights/biases/mask stay VMEM-resident via constant
    index_maps, xcol/out blocks are indexed by the grid.
    """
    inp = inp_tokens.astype(jnp.int32)
    N = inp.shape[0]
    inp = inp.reshape(N, 2, -1)              # forward() does inp.view(2, -1) per sample
    B, S = 2, inp.shape[-1]
    E = packed["embed"].shape[1]
    f1, f2 = filter_sizes
    f_max, f_min = max(filter_sizes), min(filter_sizes)
    n1 = num_filters[0]
    C = packed["wc"].shape[1]
    FEp = packed["wc"].shape[0]
    FE = f_max * E
    assert S >= f_max, "seq_len must be >= the widest conv filter"

    L = S - f_min + 1                        # longest valid conv output length
    Lp = _round_up(L, _SUBLANE)              # sublane-pad the pooling window

    # samples per grid step: multiple of 4 so the output block sublane dim
    # (spb*B) is a multiple of 8; sized so the conv matmul M dim is ~256 rows.
    if samples_per_block is None:
        spb = max(4, (256 // (B * Lp)) // 4 * 4)
    else:
        spb = samples_per_block
    spb = max(4, min(spb, _round_up(N, 4)))
    Npad = _round_up(N, spb)

    # im2col straight from the bf16 embedding table (gather + window build fused in
    # this jit): pad the token stream with padding_idx (its embedding row is zero)
    # so every window read is in-bounds; dummy samples past N are padding_idx too.
    # TODO(synk): for tiny vocabs the gather could move into the kernel via scalar
    # prefetch + a VMEM-resident embedding table, removing this HBM round trip.
    tok = jnp.full((Npad, B, Lp + f_max - 1), padding_idx, jnp.int32)
    tok = tok.at[:N, :, :S].set(inp)
    win = jnp.arange(Lp)[:, None] + jnp.arange(f_max)[None, :]       # (Lp, f_max)
    xcol = packed["embed"][tok[:, :, win]]                           # (Npad,B,Lp,f_max,E) bf16
    xcol = xcol.reshape(Npad * B * Lp, FE)
    if FEp > FE:
        xcol = jnp.pad(xcol, ((0, 0), (0, FEp - FE)))                # dense 128-lane K dim

    # static validity mask (trace-time constant): zero out time positions past each
    # filter's valid conv length; ReLU output >= 0 so the per-channel max is unchanged.
    len1, len2 = S - f1 + 1, S - f2 + 1
    pos = jnp.arange(Lp)[:, None]
    chan = jnp.arange(C)[None, :]
    mask = (pos < jnp.where(chan < n1, len1, len2)).astype(jnp.float32)   # (Lp, C)

    Mblk, Rblk = spb * B * Lp, spb * B
    grid = (Npad // spb,)

    out = pl.pallas_call(
        functools.partial(_disc_kernel, lp=Lp),
        out_shape=jax.ShapeDtypeStruct((Npad * B, C), jnp.float32),
        grid=grid,
        in_specs=[
            pl.BlockSpec((Mblk, FEp), lambda i: (i, 0)),   # xcol: per-grid block
            pl.BlockSpec((Lp, C), lambda i: (0, 0)),       # mask: VMEM-resident
            pl.BlockSpec((FEp, C), lambda i: (0, 0)),      # wc
            pl.BlockSpec((1, C), lambda i: (0, 0)),        # bc
            pl.BlockSpec((C, C), lambda i: (0, 0)),        # wh
            pl.BlockSpec((1, C), lambda i: (0, 0)),        # bh
            pl.BlockSpec((C, C), lambda i: (0, 0)),        # wo
            pl.BlockSpec((1, C), lambda i: (0, 0)),        # bo
        ],
        out_specs=pl.BlockSpec((Rblk, C), lambda i: (i, 0)),
        compiler_params=pltpu.CompilerParams(
            dimension_semantics=("parallel",)),            # 2x on v7x's two TCs
    )(xcol, mask, packed["wc"], packed["bc"], packed["wh"], packed["bh"],
      packed["wo"], packed["bo"])

    return out[:N * B, :2].reshape(N, B, 2)


def cnn_discriminator_forward(inp_tokens, packed, *, filter_sizes, num_filters,
                              padding_idx):
    """inp_tokens: int32 (batch*seq,). Returns (2, 2) logits (eval-mode forward)."""
    out = cnn_discriminator_forward_batched(
        inp_tokens.reshape(1, -1), packed, filter_sizes=filter_sizes,
        num_filters=num_filters, padding_idx=padding_idx)
    return out[0]


# --------------------------- deterministic params ----------------------------
def make_params(key, vocab_size, embed_dim, filter_sizes, num_filters,
                padding_idx):
    ks = jax.random.split(key, 10)
    feature_dim = sum(num_filters)

    embed = 0.1 * jax.random.normal(ks[0], (vocab_size, embed_dim), jnp.float32)
    embed = embed.at[padding_idx].set(0.0)               # padding_idx row = 0

    (f1, f2), (n1, n2) = filter_sizes, num_filters
    return dict(
        embed=embed,
        # Conv2d(1, n, (f, E)) weight (n, 1, f, E) -> squeeze channel -> (n, f, E)
        w1=0.1 * jax.random.normal(ks[1], (n1, f1, embed_dim), jnp.float32),
        b1=0.1 * jax.random.normal(ks[2], (1, n1), jnp.float32),
        w2=0.1 * jax.random.normal(ks[3], (n2, f2, embed_dim), jnp.float32),
        b2=0.1 * jax.random.normal(ks[4], (1, n2), jnp.float32),
        wh=0.1 * jax.random.normal(ks[5], (feature_dim, feature_dim), jnp.float32),
        bh=0.1 * jax.random.normal(ks[6], (1, feature_dim), jnp.float32),
        wo=0.1 * jax.random.normal(ks[7], (2, feature_dim), jnp.float32),
        bo=0.1 * jax.random.normal(ks[8], (1, 2), jnp.float32),
    )


# ------------------------- pure-JAX f32 reference -----------------------------
def _reference_forward(inp_tokens, params, filter_sizes):
    """Mirrors the PyTorch module (eval mode), all f32."""
    inp = inp_tokens.reshape(2, -1)
    emb = params["embed"][inp]                               # (B, S, E)
    pools = []
    for w, b, f in ((params["w1"], params["b1"], filter_sizes[0]),
                    (params["w2"], params["b2"], filter_sizes[1])):
        L = emb.shape[1] - f + 1
        conv = jnp.stack(
            [jnp.einsum("bje,nje->bn", emb[:, l:l + f, :], w) for l in range(L)],
            axis=1) + b                                      # (B, L, n)
        pools.append(jnp.max(jax.nn.relu(conv), axis=1))
    pred = jnp.concatenate(pools, axis=1)
    hw = pred @ params["wh"].T + params["bh"]
    sig = jax.nn.sigmoid(hw)
    pred = sig * jax.nn.relu(hw) + (1.0 - sig) * pred
    return pred @ params["wo"].T + params["bo"]


# --------------------------------- main ---------------------------------------
if __name__ == "__main__":
    embed_dim = 32
    vocab_size = 20
    filter_sizes = (2, 3)
    num_filters = (16, 16)     # feature_dim = 32
    padding_idx = 0
    batch, seq_len = 2, 8      # forward() forces batch = 2 via inp.view(2, -1)

    key = jax.random.PRNGKey(0)
    pkey, dkey, bkey = jax.random.split(key, 3)
    params = make_params(pkey, vocab_size, embed_dim, filter_sizes,
                         num_filters, padding_idx)
    packed = pack_kernel_params(params, filter_sizes, num_filters, padding_idx)

    # ---- single module-style invocation: (batch*seq,) -> (2, 2) ----
    inp = jax.random.randint(dkey, (batch * seq_len,), 0, vocab_size,
                             dtype=jnp.int32)
    pred = cnn_discriminator_forward(
        inp, packed, filter_sizes=filter_sizes, num_filters=num_filters,
        padding_idx=padding_idx)
    jax.block_until_ready(pred)
    assert pred.shape == (2, 2) and pred.dtype == jnp.float32

    ref = _reference_forward(inp, params, filter_sizes)
    err = float(jnp.max(jnp.abs(pred - ref)))
    assert err < 3e-2, f"kernel/reference mismatch: max abs err {err}"

    # ---- batched variant: many invocations through one gridded pallas_call ----
    n_samples = 6
    inp_b = jax.random.randint(bkey, (n_samples, batch * seq_len), 0, vocab_size,
                               dtype=jnp.int32)
    pred_b = cnn_discriminator_forward_batched(
        inp_b, packed, filter_sizes=filter_sizes, num_filters=num_filters,
        padding_idx=padding_idx)
    jax.block_until_ready(pred_b)
    assert pred_b.shape == (n_samples, 2, 2) and pred_b.dtype == jnp.float32

    ref_b = jnp.stack([_reference_forward(inp_b[i], params, filter_sizes)
                       for i in range(n_samples)])
    err_b = float(jnp.max(jnp.abs(pred_b - ref_b)))
    assert err_b < 3e-2, f"batched kernel/reference mismatch: max abs err {err_b}"

    print("KERNEL_OK")
</pallas_src>

<mosaic_0001>
module attributes {stable_mosaic.version = 11 : i64} {
  func.func @_disc_kernel(%arg0: i32, %arg1: memref<64x128xbf16, #tpu.memory_space<vmem>>, %arg2: memref<8x128xf32, #tpu.memory_space<vmem>>, %arg3: memref<128x128xbf16, #tpu.memory_space<vmem>>, %arg4: memref<1x128xf32, #tpu.memory_space<vmem>>, %arg5: memref<128x128xbf16, #tpu.memory_space<vmem>>, %arg6: memref<1x128xf32, #tpu.memory_space<vmem>>, %arg7: memref<128x128xbf16, #tpu.memory_space<vmem>>, %arg8: memref<1x128xf32, #tpu.memory_space<vmem>>, %arg9: memref<8x128xf32, #tpu.memory_space<vmem>>) attributes {dimension_semantics = [#tpu.dimension_semantics<parallel>], iteration_bounds = array<i64: 1>, scalar_prefetch = 0 : i64, scratch_operands = 0 : i64, tpu.core_type = #tpu.core_type<tc>, window_params = [{transform_indices = @transform_0, window_bounds = array<i64: 64, 128>}, {pipeline_mode = #tpu.pipeline_mode<synchronous>, transform_indices = @transform_1, window_bounds = array<i64: 8, 128>}, {pipeline_mode = #tpu.pipeline_mode<synchronous>, transform_indices = @transform_2, window_bounds = array<i64: 128, 128>}, {pipeline_mode = #tpu.pipeline_mode<synchronous>, transform_indices = @transform_3, window_bounds = array<i64: 1, 128>}, {pipeline_mode = #tpu.pipeline_mode<synchronous>, transform_indices = @transform_4, window_bounds = array<i64: 128, 128>}, {pipeline_mode = #tpu.pipeline_mode<synchronous>, transform_indices = @transform_5, window_bounds = array<i64: 1, 128>}, {pipeline_mode = #tpu.pipeline_mode<synchronous>, transform_indices = @transform_6, window_bounds = array<i64: 128, 128>}, {pipeline_mode = #tpu.pipeline_mode<synchronous>, transform_indices = @transform_7, window_bounds = array<i64: 1, 128>}, {transform_indices = @transform_8, window_bounds = array<i64: 8, 128>}]} {
    %c0 = arith.constant 0 : index
    %c0_0 = arith.constant 0 : index
    %0 = vector.load %arg1[%c0, %c0_0] : memref<64x128xbf16, #tpu.memory_space<vmem>>, vector<64x128xbf16>
    %c0_1 = arith.constant 0 : index
    %c0_2 = arith.constant 0 : index
    %1 = vector.load %arg3[%c0_1, %c0_2] : memref<128x128xbf16, #tpu.memory_space<vmem>>, vector<128x128xbf16>
    %cst = arith.constant dense<0.000000e+00> : vector<64x128xf32>
    %2 = tpu.matmul %0, %1, %cst {dimension_numbers = #tpu.dot_dimension_numbers<[1], [0], [0], [1], [0, 0, 1, 1], [], []>} : vector<64x128xbf16>, vector<128x128xbf16>, vector<64x128xf32> -> vector<64x128xf32>
    %c0_3 = arith.constant 0 : index
    %c0_4 = arith.constant 0 : index
    %3 = vector.load %arg4[%c0_3, %c0_4] : memref<1x128xf32, #tpu.memory_space<vmem>>, vector<1x128xf32>
    %4 = vector.broadcast %3 : vector<1x128xf32> to vector<64x128xf32>
    %5 = arith.addf %2, %4 : vector<64x128xf32>
    %cst_5 = arith.constant 0.000000e+00 : f32
    %6 = vector.broadcast %cst_5 : f32 to vector<64x128xf32>
    %7 = arith.maximumf %5, %6 : vector<64x128xf32>
    %8 = vector.shape_cast %7 : vector<64x128xf32> to vector<8x8x128xf32>
    %c0_6 = arith.constant 0 : index
    %c0_7 = arith.constant 0 : index
    %9 = vector.load %arg2[%c0_6, %c0_7] : memref<8x128xf32, #tpu.memory_space<vmem>>, vector<8x128xf32>
    %10 = vector.shape_cast %9 : vector<8x128xf32> to vector<1x8x128xf32>
    %11 = vector.broadcast %10 : vector<1x8x128xf32> to vector<8x8x128xf32>
    %12 = arith.mulf %8, %11 : vector<8x8x128xf32>
    %cst_8 = arith.constant dense<0xFF800000> : vector<8x128xf32>
    %13 = vector.multi_reduction <maximumf>, %12, %cst_8 [1] : vector<8x8x128xf32> to vector<8x128xf32>
    %14 = arith.truncf %13 : vector<8x128xf32> to vector<8x128xbf16>
    %c0_9 = arith.constant 0 : index
    %c0_10 = arith.constant 0 : index
    %15 = vector.load %arg5[%c0_9, %c0_10] : memref<128x128xbf16, #tpu.memory_space<vmem>>, vector<128x128xbf16>
    %cst_11 = arith.constant dense<0.000000e+00> : vector<8x128xf32>
    %16 = tpu.matmul %14, %15, %cst_11 {dimension_numbers = #tpu.dot_dimension_numbers<[1], [0], [0], [1], [0, 0, 1, 1], [], []>} : vector<8x128xbf16>, vector<128x128xbf16>, vector<8x128xf32> -> vector<8x128xf32>
    %c0_12 = arith.constant 0 : index
    %c0_13 = arith.constant 0 : index
    %17 = vector.load %arg6[%c0_12, %c0_13] : memref<1x128xf32, #tpu.memory_space<vmem>>, vector<1x128xf32>
    %18 = vector.broadcast %17 : vector<1x128xf32> to vector<8x128xf32>
    %19 = arith.addf %16, %18 : vector<8x128xf32>
    %20 = arith.negf %19 : vector<8x128xf32>
    %21 = math.exp %20 : vector<8x128xf32>
    %cst_14 = arith.constant 1.000000e+00 : f32
    %22 = vector.broadcast %cst_14 : f32 to vector<8x128xf32>
    %23 = arith.addf %22, %21 : vector<8x128xf32>
    %24 = arith.divf %22, %23 : vector<8x128xf32>
    %cst_15 = arith.constant 0.000000e+00 : f32
    %25 = vector.broadcast %cst_15 : f32 to vector<8x128xf32>
    %26 = arith.maximumf %19, %25 : vector<8x128xf32>
    %27 = arith.mulf %24, %26 : vector<8x128xf32>
    %cst_16 = arith.constant 1.000000e+00 : f32
    %28 = vector.broadcast %cst_16 : f32 to vector<8x128xf32>
    %29 = arith.subf %28, %24 : vector<8x128xf32>
    %30 = arith.mulf %29, %13 : vector<8x128xf32>
    %31 = arith.addf %27, %30 : vector<8x128xf32>
    %32 = arith.truncf %31 : vector<8x128xf32> to vector<8x128xbf16>
    %c0_17 = arith.constant 0 : index
    %c0_18 = arith.constant 0 : index
    %33 = vector.load %arg7[%c0_17, %c0_18] : memref<128x128xbf16, #tpu.memory_space<vmem>>, vector<128x128xbf16>
    %cst_19 = arith.constant dense<0.000000e+00> : vector<8x128xf32>
    %34 = tpu.matmul %32, %33, %cst_19 {dimension_numbers = #tpu.dot_dimension_numbers<[1], [0], [0], [1], [0, 0, 1, 1], [], []>} : vector<8x128xbf16>, vector<128x128xbf16>, vector<8x128xf32> -> vector<8x128xf32>
    %c0_20 = arith.constant 0 : index
    %c0_21 = arith.constant 0 : index
    %35 = vector.load %arg8[%c0_20, %c0_21] : memref<1x128xf32, #tpu.memory_space<vmem>>, vector<1x128xf32>
    %36 = vector.broadcast %35 : vector<1x128xf32> to vector<8x128xf32>
    %37 = arith.addf %34, %36 : vector<8x128xf32>
    %c0_22 = arith.constant 0 : index
    %c0_23 = arith.constant 0 : index
    %38 = vector.load %arg9[%c0_22, %c0_23] : memref<8x128xf32, #tpu.memory_space<vmem>>, vector<8x128xf32>
    tpu.vector_store %arg9[%c0_22, %c0_23], %37 {strides = array<i32>} : memref<8x128xf32, #tpu.memory_space<vmem>>, vector<8x128xf32>,
    return
  }
  func.func @transform_0(%arg0: i32) -> (i32, i32) {
    %c0_i32 = arith.constant 0 : i32
    %c0_i32_0 = arith.constant 0 : i32
    return %arg0, %c0_i32 : i32, i32
  }
  func.func @transform_1(%arg0: i32) -> (i32, i32) {
    %c0_i32 = arith.constant 0 : i32
    %c0_i32_0 = arith.constant 0 : i32
    %c0_i32_1 = arith.constant 0 : i32
    return %c0_i32, %c0_i32_0 : i32, i32
  }
  func.func @transform_2(%arg0: i32) -> (i32, i32) {
    %c0_i32 = arith.constant 0 : i32
    %c0_i32_0 = arith.constant 0 : i32
    %c0_i32_1 = arith.constant 0 : i32
    return %c0_i32, %c0_i32_0 : i32, i32
  }
  func.func @transform_3(%arg0: i32) -> (i32, i32) {
    %c0_i32 = arith.constant 0 : i32
    %c0_i32_0 = arith.constant 0 : i32
    %c0_i32_1 = arith.constant 0 : i32
    return %c0_i32, %c0_i32_0 : i32, i32
  }
  func.func @transform_4(%arg0: i32) -> (i32, i32) {
    %c0_i32 = arith.constant 0 : i32
    %c0_i32_0 = arith.constant 0 : i32
    %c0_i32_1 = arith.constant 0 : i32
    return %c0_i32, %c0_i32_0 : i32, i32
  }
  func.func @transform_5(%arg0: i32) -> (i32, i32) {
    %c0_i32 = arith.constant 0 : i32
    %c0_i32_0 = arith.constant 0 : i32
    %c0_i32_1 = arith.constant 0 : i32
    return %c0_i32, %c0_i32_0 : i32, i32
  }
  func.func @transform_6(%arg0: i32) -> (i32, i32) {
    %c0_i32 = arith.constant 0 : i32
    %c0_i32_0 = arith.constant 0 : i32
    %c0_i32_1 = arith.constant 0 : i32
    return %c0_i32, %c0_i32_0 : i32, i32
  }
  func.func @transform_7(%arg0: i32) -> (i32, i32) {
    %c0_i32 = arith.constant 0 : i32
    %c0_i32_0 = arith.constant 0 : i32
    %c0_i32_1 = arith.constant 0 : i32
    return %c0_i32, %c0_i32_0 : i32, i32
  }
  func.func @transform_8(%arg0: i32) -> (i32, i32) {
    %c0_i32 = arith.constant 0 : i32
    %c0_i32_0 = arith.constant 0 : i32
    return %arg0, %c0_i32 : i32, i32
  }
}

</mosaic_0001>

<llo_original>
// kernel: cnn_discriminator_forward_batched.1
$region0: #{cnn_discriminator_forward_batched.1}
  #allocation0 [shape = 'u32[]', space=smem, size = 0x4, offset = 0x4, fixed_abs, tag = 'smem constant byte address 0x4 - core index']
  #allocation1 [shape = 'u32[72,128]{1,0:T(1,128)}', space=vmem, size = 0x9000, scoped, tag = 'internal scratch']
  %s0 = inlined_call_operand.vmem [shape: bf16[64,128], index: 0, kind: input, shape index: {}]
  %s1 = inlined_call_operand.vmem [shape: f32[8,128], index: 1, kind: input, shape index: {}]
  %s2 = inlined_call_operand.vmem [shape: bf16[128,128], index: 2, kind: input, shape index: {}]
  %s3 = inlined_call_operand.vmem [shape: f32[1,128], index: 3, kind: input, shape index: {}]
  %s4 = inlined_call_operand.vmem [shape: bf16[128,128], index: 4, kind: input, shape index: {}]
  %s5 = inlined_call_operand.vmem [shape: f32[1,128], index: 5, kind: input, shape index: {}]
  %s6 = inlined_call_operand.vmem [shape: bf16[128,128], index: 6, kind: input, shape index: {}]
  %s7 = inlined_call_operand.vmem [shape: f32[1,128], index: 7, kind: input, shape index: {}]
  %s8 = inlined_call_operand.vmem [shape: f32[8,128], index: 8, kind: output, shape index: {}]
  %s9 = sld [smem:[#allocation0]]
  $region42: #{cnn_discriminator_forward_batched.1} parent=0
    _
  %s11 = ssub.s32 1, %s9
  %s12 = scalar_select 0, %s11, %s9
  // Predicated region
  $region2: #{cnn_discriminator_forward_batched.1} parent=0 // pred_check
    _
  $region3: #{cnn_discriminator_forward_batched.1} parent=0 // pred_check_branch
    %14 = sbr.rel (0) target = $region5
  $region4: #{cnn_discriminator_forward_batched.1} parent=0 // pred_region
    _
  $region5: #{cnn_discriminator_forward_batched.1} parent=0 // pred_fallthru
    _
  // Predicated region
  $region6: #{cnn_discriminator_forward_batched.1} parent=0 // pred_check
    _
  $region7: #{cnn_discriminator_forward_batched.1} parent=0 // pred_check_branch
    %16 = sbr.rel (0) target = $region9
  $region8: #{cnn_discriminator_forward_batched.1} parent=0 // pred_region
    _
  $region9: #{cnn_discriminator_forward_batched.1} parent=0 // pred_fallthru
    _
  // Predicated region
  $region10: #{cnn_discriminator_forward_batched.1} parent=0 // pred_check
    _
  $region11: #{cnn_discriminator_forward_batched.1} parent=0 // pred_check_branch
    %18 = sbr.rel (0) target = $region13
  $region12: #{cnn_discriminator_forward_batched.1} parent=0 // pred_region
    _
  $region13: #{cnn_discriminator_forward_batched.1} parent=0 // pred_fallthru
    _
  // Predicated region
  $region14: #{cnn_discriminator_forward_batched.1} parent=0 // pred_check
    _
  $region15: #{cnn_discriminator_forward_batched.1} parent=0 // pred_check_branch
    %20 = sbr.rel (0) target = $region17
  $region16: #{cnn_discriminator_forward_batched.1} parent=0 // pred_region
    _
  $region17: #{cnn_discriminator_forward_batched.1} parent=0 // pred_fallthru
    _
  // Predicated region
  $region18: #{cnn_discriminator_forward_batched.1} parent=0 // pred_check
    _
  $region19: #{cnn_discriminator_forward_batched.1} parent=0 // pred_check_branch
    %22 = sbr.rel (0) target = $region21
  $region20: #{cnn_discriminator_forward_batched.1} parent=0 // pred_region
    _
  $region21: #{cnn_discriminator_forward_batched.1} parent=0 // pred_fallthru
    _
  // Predicated region
  $region22: #{cnn_discriminator_forward_batched.1} parent=0 // pred_check
    _
  $region23: #{cnn_discriminator_forward_batched.1} parent=0 // pred_check_branch
    %24 = sbr.rel (0) target = $region25
  $region24: #{cnn_discriminator_forward_batched.1} parent=0 // pred_region
    _
  $region25: #{cnn_discriminator_forward_batched.1} parent=0 // pred_fallthru
    _
  // Predicated region
  $region26: #{cnn_discriminator_forward_batched.1} parent=0 // pred_check
    _
  $region27: #{cnn_discriminator_forward_batched.1} parent=0 // pred_check_branch
    %26 = sbr.rel (0) target = $region29
  $region28: #{cnn_discriminator_forward_batched.1} parent=0 // pred_region
    _
  $region29: #{cnn_discriminator_forward_batched.1} parent=0 // pred_fallthru
    _
  // Predicated region
  $region30: #{cnn_discriminator_forward_batched.1} parent=0 // pred_check
    _
  $region31: #{cnn_discriminator_forward_batched.1} parent=0 // pred_check_branch
    %28 = sbr.rel (0) target = $region33
  $region32: #{cnn_discriminator_forward_batched.1} parent=0 // pred_region
    _
  $region33: #{cnn_discriminator_forward_batched.1} parent=0 // pred_fallthru
    _
  %v29 = vld [vmem:[%s0] sm:$0xf]
  %v30 = vld [vmem:[%s0 + $0x4] sm:$0xf]
  %v31 = vld [vmem:[%s0 + $0x8] sm:$0xf]
  %v32 = vld [vmem:[%s0 + $0xc] sm:$0xf]
  %v33 = vld [vmem:[%s0 + $0x10] sm:$0xf]
  %v34 = vld [vmem:[%s0 + $0x14] sm:$0xf]
  %v35 = vld [vmem:[%s0 + $0x18] sm:$0xf]
  %v36 = vld [vmem:[%s0 + $0x1c] sm:$0xf]
  %v37 = vld [vmem:[%s2] sm:$0xf]
  %v38 = vld [vmem:[%s2 + $0x4] sm:$0xf]
  %v39 = vld [vmem:[%s2 + $0x8] sm:$0xf]
  %v40 = vld [vmem:[%s2 + $0xc] sm:$0xf]
  %v41 = vld [vmem:[%s2 + $0x10] sm:$0xf]
  %v42 = vld [vmem:[%s2 + $0x14] sm:$0xf]
  %v43 = vld [vmem:[%s2 + $0x18] sm:$0xf]
  %v44 = vld [vmem:[%s2 + $0x1c] sm:$0xf]
  %v45 = vld [vmem:[%s2 + $0x20] sm:$0xf]
  %v46 = vld [vmem:[%s2 + $0x24] sm:$0xf]
  %v47 = vld [vmem:[%s2 + $0x28] sm:$0xf]
  %v48 = vld [vmem:[%s2 + $0x2c] sm:$0xf]
  %v49 = vld [vmem:[%s2 + $0x30] sm:$0xf]
  %v50 = vld [vmem:[%s2 + $0x34] sm:$0xf]
  %v51 = vld [vmem:[%s2 + $0x38] sm:$0xf]
  %v52 = vld [vmem:[%s2 + $0x3c] sm:$0xf]
  %v53 = vld [vmem:[%s3] sm:$0x1]
  %v55 = vperm.slane %v53, 0
  %v65 = vunpack.c.l.b16 %v29
  %v66 = vunpack.c.l.b16 %v30
  %v67 = vunpack.c.l.b16 %v31
  %v68 = vunpack.c.l.b16 %v32
  %v69 = vunpack.c.l.b16 %v33
  %v70 = vunpack.c.l.b16 %v34
  %v71 = vunpack.c.l.b16 %v35
  %v72 = vunpack.c.l.b16 %v36
  %v73 = vpack.c.b16 %v66, %v65
  %v74 = vpack.c.b16 %v68, %v67
  %v75 = vpack.c.b16 %v70, %v69
  %v76 = vpack.c.b16 %v72, %v71
  %v97 = vunpack.c.l.b16 %v37
  %v98 = vunpack.c.l.b16 %v38
  %v99 = vunpack.c.l.b16 %v39
  %v100 = vunpack.c.l.b16 %v40
  %v101 = vunpack.c.l.b16 %v41
  %v102 = vunpack.c.l.b16 %v42
  %v103 = vunpack.c.l.b16 %v43
  %v104 = vunpack.c.l.b16 %v44
  %v105 = vunpack.c.l.b16 %v45
  %v106 = vunpack.c.l.b16 %v46
  %v107 = vunpack.c.l.b16 %v47
  %v108 = vunpack.c.l.b16 %v48
  %v109 = vunpack.c.l.b16 %v49
  %v110 = vunpack.c.l.b16 %v50
  %v111 = vunpack.c.l.b16 %v51
  %v112 = vunpack.c.l.b16 %v52
  %v113 = vpack.c.b16 %v98, %v97
  %v114 = vpack.c.b16 %v100, %v99
  %v115 = vpack.c.b16 %v102, %v101
  %v116 = vpack.c.b16 %v104, %v103
  %v117 = vpack.c.b16 %v106, %v105
  %v118 = vpack.c.b16 %v108, %v107
  %v119 = vpack.c.b16 %v110, %v109
  %v120 = vpack.c.b16 %v112, %v111
  %129 = vmatpush.bf16.msra.mxu0 %v120
  %130 = vmatpush.bf16.msra.mxu0 %v119
  %131 = vmatpush.bf16.msra.mxu0 %v118
  %132 = vmatpush.bf16.msra.mxu0 %v117
  %133 = vmatpush.bf16.msra.mxu0 %v116
  %134 = vmatpush.bf16.msra.mxu0 %v115
  %135 = vmatpush.bf16.msra.mxu0 %v114
  %136 = vmatpush.bf16.msra.mxu0 %v113
  %137 = vmatmul.bf16.gmra.mxu0 %v73
  %v138 = vpop.f32.mrf.mxu0
  %v139 = vadd.f32 %v55, %v138
  %v140 = vpop.f32.mrf.mxu0
  %v141 = vadd.f32 %v55, %v140
  %142 = vmatmul.bf16.gmra.mxu0 %v74
  %v143 = vpop.f32.mrf.mxu0
  %v144 = vadd.f32 %v55, %v143
  %v145 = vpop.f32.mrf.mxu0
  %v146 = vadd.f32 %v55, %v145
  %147 = vmatmul.bf16.gmra.mxu0 %v75
  %v148 = vpop.f32.mrf.mxu0
  %v149 = vadd.f32 %v55, %v148
  %v150 = vpop.f32.mrf.mxu0
  %v151 = vadd.f32 %v55, %v150
  %152 = vmatmul.bf16.gmra.mxu0 %v76
  %v153 = vpop.f32.mrf.mxu0
  %v154 = vadd.f32 %v55, %v153
  %v155 = vpop.f32.mrf.mxu0
  %v156 = vadd.f32 %v55, %v155
  %157 = vdwg.mxu0
  %v158 = vmax.f32 %v139, 0.0
  %v159 = vmax.f32 %v141, 0.0
  %v160 = vmax.f32 %v144, 0.0
  %v161 = vmax.f32 %v146, 0.0
  %v162 = vmax.f32 %v149, 0.0
  %v163 = vmax.f32 %v151, 0.0
  %v164 = vmax.f32 %v154, 0.0
  %v165 = vmax.f32 %v156, 0.0
  %v166 = vld [vmem:[%s1] sm:$0xff]
  %v167 = vmul.f32 %v158, %v166
  %v168 = vmul.f32 %v159, %v166
  %v169 = vmul.f32 %v160, %v166
  %v170 = vmul.f32 %v161, %v166
  %v171 = vmul.f32 %v162, %v166
  %v172 = vmul.f32 %v163, %v166
  %v173 = vmul.f32 %v164, %v166
  %v174 = vmul.f32 %v165, %v166
  %v175 = vrot.slane %v167, 4
  %v176 = vmax.f32 %v167, %v175
  %v177 = vrot.slane %v176, 2
  %v178 = vmax.f32 %v176, %v177
  %v179 = vrot.slane %v178, 1
  %v180 = vmax.f32 %v178, %v179
  %v181 = vrot.slane %v168, 4
  %v182 = vmax.f32 %v168, %v181
  %v183 = vrot.slane %v182, 2
  %v184 = vmax.f32 %v182, %v183
  %v185 = vrot.slane %v184, 1
  %v186 = vmax.f32 %v184, %v185
  %v187 = vrot.slane %v169, 4
  %v188 = vmax.f32 %v169, %v187
  %v189 = vrot.slane %v188, 2
  %v190 = vmax.f32 %v188, %v189
  %v191 = vrot.slane %v190, 1
  %v192 = vmax.f32 %v190, %v191
  %v193 = vrot.slane %v170, 4
  %v194 = vmax.f32 %v170, %v193
  %v195 = vrot.slane %v194, 2
  %v196 = vmax.f32 %v194, %v195
  %v197 = vrot.slane %v196, 1
  %v198 = vmax.f32 %v196, %v197
  %v199 = vrot.slane %v171, 4
  %v200 = vmax.f32 %v171, %v199
  %v201 = vrot.slane %v200, 2
  %v202 = vmax.f32 %v200, %v201
  %v203 = vrot.slane %v202, 1
  %v204 = vmax.f32 %v202, %v203
  %v205 = vrot.slane %v172, 4
  %v206 = vmax.f32 %v172, %v205
  %v207 = vrot.slane %v206, 2
  %v208 = vmax.f32 %v206, %v207
  %v209 = vrot.slane %v208, 1
  %v210 = vmax.f32 %v208, %v209
  %v211 = vrot.slane %v173, 4
  %v212 = vmax.f32 %v173, %v211
  %v213 = vrot.slane %v212, 2
  %v214 = vmax.f32 %v212, %v213
  %v215 = vrot.slane %v214, 1
  %v216 = vmax.f32 %v214, %v215
  %v217 = vrot.slane %v174, 4
  %v218 = vmax.f32 %v174, %v217
  %v219 = vrot.slane %v218, 2
  %v220 = vmax.f32 %v218, %v219
  %v221 = vrot.slane %v220, 1
  %v222 = vmax.f32 %v220, %v221
  %v223 = vpack.c.bf16 %v180, %v180
  %v224 = vpack.c.bf16 %v186, %v186
  %v225 = vpack.c.bf16 %v192, %v192
  %v226 = vpack.c.bf16 %v198, %v198
  %v227 = vpack.c.bf16 %v204, %v204
  %v228 = vpack.c.bf16 %v210, %v210
  %v229 = vpack.c.bf16 %v216, %v216
  %v230 = vpack.c.bf16 %v222, %v222
  %v231 = vld [vmem:[%s4] sm:$0xf]
  %v232 = vld [vmem:[%s4 + $0x4] sm:$0xf]
  %v233 = vld [vmem:[%s4 + $0x8] sm:$0xf]
  %v234 = vld [vmem:[%s4 + $0xc] sm:$0xf]
  %v235 = vld [vmem:[%s4 + $0x10] sm:$0xf]
  %v236 = vld [vmem:[%s4 + $0x14] sm:$0xf]
  %v237 = vld [vmem:[%s4 + $0x18] sm:$0xf]
  %v238 = vld [vmem:[%s4 + $0x1c] sm:$0xf]
  %v239 = vld [vmem:[%s4 + $0x20] sm:$0xf]
  %v240 = vld [vmem:[%s4 + $0x24] sm:$0xf]
  %v241 = vld [vmem:[%s4 + $0x28] sm:$0xf]
  %v242 = vld [vmem:[%s4 + $0x2c] sm:$0xf]
  %v243 = vld [vmem:[%s4 + $0x30] sm:$0xf]
  %v244 = vld [vmem:[%s4 + $0x34] sm:$0xf]
  %v245 = vld [vmem:[%s4 + $0x38] sm:$0xf]
  %v246 = vld [vmem:[%s4 + $0x3c] sm:$0xf]
  %v247 = vld [vmem:[%s5] sm:$0x1]
  %v249 = vperm.slane %v247, 0
  %v259 = vunpack.c.l.b16 %v223
  %v260 = vunpack.c.l.b16 %v224
  %v261 = vunpack.c.l.b16 %v225
  %v262 = vunpack.c.l.b16 %v226
  %v263 = vunpack.c.l.b16 %v227
  %v264 = vunpack.c.l.b16 %v228
  %v265 = vunpack.c.l.b16 %v229
  %v266 = vunpack.c.l.b16 %v230
  %vm267 = vcmask 1041409
  %v268 = vsel %vm267, %v260, %v259
  %vm269 = vcmask 1042434
  %v270 = vsel %vm269, %v261, %v268
  %vm271 = vcmask 1043459
  %v272 = vsel %vm271, %v262, %v270
  %vm273 = vcmask 1044484
  %v274 = vsel %vm273, %v263, %v272
  %vm275 = vcmask 1045509
  %v276 = vsel %vm275, %v264, %v274
  %vm277 = vcmask 1046534
  %v278 = vsel %vm277, %v265, %v276
  %vm279 = vcmask 1047559
  %v280 = vsel %vm279, %v266, %v278
  %v281 = vpack.c.b16 %v280, %v280
  %v299 = vunpack.c.l.b16 %v231
  %v300 = vunpack.c.l.b16 %v232
  %v301 = vunpack.c.l.b16 %v233
  %v302 = vunpack.c.l.b16 %v234
  %v303 = vunpack.c.l.b16 %v235
  %v304 = vunpack.c.l.b16 %v236
  %v305 = vunpack.c.l.b16 %v237
  %v306 = vunpack.c.l.b16 %v238
  %v307 = vunpack.c.l.b16 %v239
  %v308 = vunpack.c.l.b16 %v240
  %v309 = vunpack.c.l.b16 %v241
  %v310 = vunpack.c.l.b16 %v242
  %v311 = vunpack.c.l.b16 %v243
  %v312 = vunpack.c.l.b16 %v244
  %v313 = vunpack.c.l.b16 %v245
  %v314 = vunpack.c.l.b16 %v246
  %v315 = vpack.c.b16 %v300, %v299
  %v316 = vpack.c.b16 %v302, %v301
  %v317 = vpack.c.b16 %v304, %v303
  %v318 = vpack.c.b16 %v306, %v305
  %v319 = vpack.c.b16 %v308, %v307
  %v320 = vpack.c.b16 %v310, %v309
  %v321 = vpack.c.b16 %v312, %v311
  %v322 = vpack.c.b16 %v314, %v313
  %331 = vmatpush.bf16.msra.mxu0 %v322
  %332 = vmatpush.bf16.msra.mxu0 %v321
  %333 = vmatpush.bf16.msra.mxu0 %v320
  %334 = vmatpush.bf16.msra.mxu0 %v319
  %335 = vmatpush.bf16.msra.mxu0 %v318
  %336 = vmatpush.bf16.msra.mxu0 %v317
  %337 = vmatpush.bf16.msra.mxu0 %v316
  %338 = vmatpush.bf16.msra.mxu0 %v315
  %339 = vmatmul.bf16.gmra.mxu0 %v281
  %v340 = vpop.f32.mrf.mxu0
  %v341 = vadd.f32 %v249, %v340
  %v342 = vpop.f32.mrf.mxu0
  %343 = vdwg.mxu0
  %v344 = vxor.u32 %v341, 2147483648
  %v345 = vmul.f32 %v344, 1.442695
  %v346 = vpow.pop %v345
  %v347 = vadd.f32 %v346, 1.0
  %v348 = vrcp.pop %v347
  %v349 = vmul.f32 %v347, %v348
  %v350 = vsub.f32 1.0, %v349
  %v351 = vmul.f32 %v348, %v350
  %v352 = vadd.f32 %v348, %v351
  %vm353 = vweird.f32 %v347
  %vm354 = vweird.f32 %v348
  %vm355 = vmor %vm353, %vm354
  %v356 = vsel %vm355, %v348, %v352
  %v357 = vand.u32 2147483647, %v347
  %vm358 = vcmp.eq.f32.partialorder %v357, 8.507059e+37
  %v359 = vand.u32 %v347, 2147483648
  %v360 = vor.u32 1.1754944e-38, %v359
  %v361 = vsel %vm358, %v360, %v356
  %v362 = vmul.f32 1.0, %v361
  %v363 = vmax.f32 %v341, 0.0
  %v364 = vmul.f32 %v362, %v363
  %v365 = vsub.f32 1.0, %v362
  %v374 = vsel %vm267, %v186, %v180
  %v375 = vsel %vm269, %v192, %v374
  %v376 = vsel %vm271, %v198, %v375
  %v377 = vsel %vm273, %v204, %v376
  %v378 = vsel %vm275, %v210, %v377
  %v379 = vsel %vm277, %v216, %v378
  %v380 = vsel %vm279, %v222, %v379
  %v382 = vmul.f32 %v365, %v380
  %v383 = vadd.f32 %v364, %v382
  %v384 = vpack.c.bf16 %v383, %v383
  %v385 = vld [vmem:[%s6] sm:$0xf]
  %v386 = vld [vmem:[%s6 + $0x4] sm:$0xf]
  %v387 = vld [vmem:[%s6 + $0x8] sm:$0xf]
  %v388 = vld [vmem:[%s6 + $0xc] sm:$0xf]
  %v389 = vld [vmem:[%s6 + $0x10] sm:$0xf]
  %v390 = vld [vmem:[%s6 + $0x14] sm:$0xf]
  %v391 = vld [vmem:[%s6 + $0x18] sm:$0xf]
  %v392 = vld [vmem:[%s6 + $0x1c] sm:$0xf]
  %v393 = vld [vmem:[%s6 + $0x20] sm:$0xf]
  %v394 = vld [vmem:[%s6 + $0x24] sm:$0xf]
  %v395 = vld [vmem:[%s6 + $0x28] sm:$0xf]
  %v396 = vld [vmem:[%s6 + $0x2c] sm:$0xf]
  %v397 = vld [vmem:[%s6 + $0x30] sm:$0xf]
  %v398 = vld [vmem:[%s6 + $0x34] sm:$0xf]
  %v399 = vld [vmem:[%s6 + $0x38] sm:$0xf]
  %v400 = vld [vmem:[%s6 + $0x3c] sm:$0xf]
  %v401 = vld [vmem:[%s7] sm:$0x1]
  %v403 = vperm.slane %v401, 0
  %v421 = vunpack.c.l.b16 %v385
  %v422 = vunpack.c.l.b16 %v386
  %v423 = vunpack.c.l.b16 %v387
  %v424 = vunpack.c.l.b16 %v388
  %v425 = vunpack.c.l.b16 %v389
  %v426 = vunpack.c.l.b16 %v390
  %v427 = vunpack.c.l.b16 %v391
  %v428 = vunpack.c.l.b16 %v392
  %v429 = vunpack.c.l.b16 %v393
  %v430 = vunpack.c.l.b16 %v394
  %v431 = vunpack.c.l.b16 %v395
  %v432 = vunpack.c.l.b16 %v396
  %v433 = vunpack.c.l.b16 %v397
  %v434 = vunpack.c.l.b16 %v398
  %v435 = vunpack.c.l.b16 %v399
  %v436 = vunpack.c.l.b16 %v400
  %v437 = vpack.c.b16 %v422, %v421
  %v438 = vpack.c.b16 %v424, %v423
  %v439 = vpack.c.b16 %v426, %v425
  %v440 = vpack.c.b16 %v428, %v427
  %v441 = vpack.c.b16 %v430, %v429
  %v442 = vpack.c.b16 %v432, %v431
  %v443 = vpack.c.b16 %v434, %v433
  %v444 = vpack.c.b16 %v436, %v435
  %453 = vmatpush.bf16.msra.mxu0 %v444
  %454 = vmatpush.bf16.msra.mxu0 %v443
  %455 = vmatpush.bf16.msra.mxu0 %v442
  %456 = vmatpush.bf16.msra.mxu0 %v441
  %457 = vmatpush.bf16.msra.mxu0 %v440
  %458 = vmatpush.bf16.msra.mxu0 %v439
  %459 = vmatpush.bf16.msra.mxu0 %v438
  %460 = vmatpush.bf16.msra.mxu0 %v437
  %461 = vmatmul.bf16.gmra.mxu0 %v384
  %v462 = vpop.f32.mrf.mxu0
  %v463 = vadd.f32 %v403, %v462
  %v464 = vpop.f32.mrf.mxu0
  %465 = vdwg.mxu0
  %466 = vst [vmem:[%s8] sm:$0xff] %v463
  // Predicated region
  $region34: #{cnn_discriminator_forward_batched.1} parent=0 // pred_check
    _
  $region35: #{cnn_discriminator_forward_batched.1} parent=0 // pred_check_branch
    %468 = sbr.rel (0) target = $region37
  $region36: #{cnn_discriminator_forward_batched.1} parent=0 // pred_region
    _
  $region37: #{cnn_discriminator_forward_batched.1} parent=0 // pred_fallthru
    _
  // Predicated region
  $region38: #{cnn_discriminator_forward_batched.1} parent=0 // pred_check
    _
  $region39: #{cnn_discriminator_forward_batched.1} parent=0 // pred_check_branch
    %470 = sbr.rel (0) target = $region41
  $region40: #{cnn_discriminator_forward_batched.1} parent=0 // pred_region
    _
  $region41: #{cnn_discriminator_forward_batched.1} parent=0 // pred_fallthru
    _

</llo_original>
